<compile_context>
chip_gen: v6e
topology: v6e:2x2x1
jax: 0.10.0
libtpu: 0.0.40
codegen_flags: <defaults>
</compile_context>

<pallas_src>
import functools
import numpy as np

import jax
import jax.numpy as jnp
from jax import lax
from jax.experimental import pallas as pl
from jax.experimental.pallas import tpu as pltpu

FEAT_C = 3          # feature channels D (default ones_like(verts_packed()) -> 3)
N_COEF = 18         # [w0 | w1 | depth | colR | colG | colB] x (a, b, c)
BACKGROUND = 1.0    # BlendParams(background_color=1) used by the 'feat' shader
Z_SENTINEL = 1e30   # "no face yet" depth
Z_COVERED = 1e29    # running depth below this => pixel covered


def _round_up(x, m):
    return ((x + m - 1) // m) * m


# --------------------------------------------------------------------------
# Pallas kernel.  grid = (batch, pixel-tile); faces streamed from SMEM.
# --------------------------------------------------------------------------
def _render_kernel(coef_ref, pix_ref, out_ref, *, n_faces, lanes):
    """Hard (sigma->0, blur_radius=0, faces_per_pixel=1) rasterization with
    screen-space-affine interpolation of Gouraud-shaded vertex features.

    coef_ref : SMEM, flattened (N * F * 18,) f32 per-face plane coefficients
               (scalar loads -> free VPU broadcast).
    pix_ref  : VMEM (2, 8, lanes) pixel-center x / y for this tile.
    out_ref  : VMEM (1, 4, 8, lanes) -> [r, g, b, silhouette alpha].

    Per-pixel running state (nearest depth + the 9 color-plane coefficients of
    the current winner) is carried purely in vregs by the fori_loop; there is
    no VMEM scratch and no slot reduction."""
    xs = pix_ref[0]                                        # (8, lanes)
    ys = pix_ref[1]
    base_b = pl.program_id(0) * (n_faces * N_COEF)

    zeros = jnp.zeros((8, lanes), jnp.float32)
    init = (jnp.full((8, lanes), Z_SENTINEL, jnp.float32),) + (zeros,) * 9

    def body(f, carry):
        z, ar, br, cr, ag, bg_, cg, ab, bb, cb = carry
        base = base_b + f * N_COEF
        c = [coef_ref[base + k] for k in range(N_COEF)]    # 18 SMEM scalar loads

        w0 = c[0] * xs + c[1] * ys + c[2]                  # edge plane 0
        w1 = c[3] * xs + c[4] * ys + c[5]                  # edge plane 1
        zf = c[6] * xs + c[7] * ys + c[8]                  # depth plane
        # inside: w0 >= 0, w1 >= 0, w2 = 1 - w0 - w1 >= 0  (strict '<' on depth
        # => first face wins exact ties, matching argmin tie-breaking).
        closer = (w0 >= 0.0) & (w1 >= 0.0) & (w0 + w1 <= 1.0) & (zf < z)

        z = jnp.where(closer, zf, z)
        # Deferred color: keep only the winner's color-plane coefficients.
        ar = jnp.where(closer, c[9], ar)
        br = jnp.where(closer, c[10], br)
        cr = jnp.where(closer, c[11], cr)
        ag = jnp.where(closer, c[12], ag)
        bg_ = jnp.where(closer, c[13], bg_)
        cg = jnp.where(closer, c[14], cg)
        ab = jnp.where(closer, c[15], ab)
        bb = jnp.where(closer, c[16], bb)
        cb = jnp.where(closer, c[17], cb)
        return (z, ar, br, cr, ag, bg_, cg, ab, bb, cb)

    (z, ar, br, cr, ag, bg_, cg, ab, bb, cb) = lax.fori_loop(0, n_faces, body, init)

    covered = z < jnp.float32(Z_COVERED)
    bg = jnp.float32(BACKGROUND)
    out_ref[0, 0] = jnp.where(covered, ar * xs + br * ys + cr, bg)
    out_ref[0, 1] = jnp.where(covered, ag * xs + bg_ * ys + cg, bg)
    out_ref[0, 2] = jnp.where(covered, ab * xs + bb * ys + cb, bg)
    out_ref[0, 3] = covered.astype(jnp.float32)            # silhouette alpha


def rasterize_pallas(face_coef, H, W):
    """face_coef: (N, F, 18) f32 -> rendered (N, 4, H, W) f32."""
    N, F, K = face_coef.shape
    assert K == N_COEF
    HW = H * W

    # Pixel tile = (8 sublanes, L lanes).  Prefer L=256 (2048 px: more VALU work
    # per face to hide the 18 scalar loads) but only if it still yields >= 2
    # parallel grid units (v7x has 2 TensorCores even at N == 1).
    if HW % 2048 == 0 and N * (HW // 2048) >= 2:
        L = 256
    else:
        L = 128
    rows = _round_up(-(-HW // L), 8)        # sublane rows, multiple of 8
    tiles = rows // 8
    hw_pad = rows * L

    # Pixel-center coordinates with the original module's flip/transpose folded
    # in: output pixel (i, j) samples (x, y) = (j + 0.5, H - 1 - i + 0.5).
    # Computed once here; padded pixels get harmless coords and are dropped.
    q = jnp.arange(hw_pad, dtype=jnp.int32)
    xs = (q % W).astype(jnp.float32) + 0.5
    ys = (H - 1 - q // W).astype(jnp.float32) + 0.5
    pix = jnp.stack([xs, ys], axis=0).reshape(2, rows, L)

    # Flattened 1-D coefficient array -> SMEM scalar prefetch (no 2-D SMEM
    # [R, C] -> [R, 128] padding waste).
    coef_flat = face_coef.astype(jnp.float32).reshape(N * F * N_COEF)

    kernel = functools.partial(_render_kernel, n_faces=F, lanes=L)
    out = pl.pallas_call(
        kernel,
        out_shape=jax.ShapeDtypeStruct((N, FEAT_C + 1, rows, L), jnp.float32),
        grid_spec=pltpu.PrefetchScalarGridSpec(
            num_scalar_prefetch=1,                     # coef_flat -> SMEM
            grid=(N, tiles),
            in_specs=[
                pl.BlockSpec((2, 8, L), lambda b, t, coef: (0, t, 0)),
            ],
            out_specs=pl.BlockSpec((1, FEAT_C + 1, 8, L),
                                   lambda b, t, coef: (b, 0, t, 0)),
        ),
        compiler_params=pltpu.CompilerParams(
            dimension_semantics=("parallel", "parallel"),
            vmem_limit_bytes=8 * 1024 * 1024),         # actual use ~0.2 MiB
    )(coef_flat, pix)

    return out.reshape(N, FEAT_C + 1, hw_pad)[:, :, :HW].reshape(N, FEAT_C + 1, H, W)


# --------------------------------------------------------------------------
# Plain-JAX glue: camera, lighting, per-face plane coefficients.
# --------------------------------------------------------------------------
def _euler_to_rotmat(ang):
    rx, ry, rz = ang[:, 0], ang[:, 1], ang[:, 2]
    cx, sx = jnp.cos(rx), jnp.sin(rx)
    cy, sy = jnp.cos(ry), jnp.sin(ry)
    cz, sz = jnp.cos(rz), jnp.sin(rz)
    one, zero = jnp.ones_like(rx), jnp.zeros_like(rx)
    Rx = jnp.stack([one, zero, zero, zero, cx, -sx, zero, sx, cx], -1).reshape(-1, 3, 3)
    Ry = jnp.stack([cy, zero, sy, zero, one, zero, -sy, zero, cy], -1).reshape(-1, 3, 3)
    Rz = jnp.stack([cz, -sz, zero, sz, cz, zero, zero, zero, one], -1).reshape(-1, 3, 3)
    return Rz @ Ry @ Rx


def _vertex_normals(verts, faces):
    v0 = verts[:, faces[:, 0]]
    v1 = verts[:, faces[:, 1]]
    v2 = verts[:, faces[:, 2]]
    fn = jnp.cross(v1 - v0, v2 - v0)                            # (N, F, 3)
    vn = jnp.zeros_like(verts)
    for k in range(3):
        vn = vn.at[:, faces[:, k]].add(fn)
    return vn / (jnp.linalg.norm(vn, axis=-1, keepdims=True) + 1e-8)


def _face_coefficients(px, py, z, vcol, faces, znear, zfar):
    """Pack per-face affine (in pixel x,y) plane coefficients:
    [w0 | w1 | depth | colR | colG | colB] x (a, b, c) -> (N, F, 18).
    w2 = 1 - w0 - w1 is recomputed in-kernel; its plane is not packed."""
    x = px[:, faces]            # (N, F, 3)
    y = py[:, faces]
    zz = z[:, faces]
    col3 = vcol[:, faces]       # (N, F, 3, C)
    x0, x1, x2 = x[..., 0], x[..., 1], x[..., 2]
    y0, y1, y2 = y[..., 0], y[..., 1], y[..., 2]
    area = (x1 - x0) * (y2 - y0) - (x2 - x0) * (y1 - y0)
    bad = jnp.abs(area) < 1e-8
    bad = bad | jnp.any(zz < znear[:, None, None], -1) \
              | jnp.any(zz > zfar[:, None, None], -1)
    inv = jnp.where(bad, 0.0, 1.0 / jnp.where(bad, 1.0, area))
    a0 = (y1 - y2) * inv; b0 = (x2 - x1) * inv; c0 = (x1 * y2 - x2 * y1) * inv
    a1 = (y2 - y0) * inv; b1 = (x0 - x2) * inv; c1 = (x2 * y0 - x0 * y2) * inv

    def combine(vals):
        # value(x,y) = w0*v0 + w1*v1 + (1 - w0 - w1)*v2
        #            = v2 + w0*(v0 - v2) + w1*(v1 - v2)
        v0, v1, v2 = vals[..., 0], vals[..., 1], vals[..., 2]
        d0, d1 = v0 - v2, v1 - v2
        return (a0 * d0 + a1 * d1,
                b0 * d0 + b1 * d1,
                v2 + c0 * d0 + c1 * d1)

    az, bz, cz = combine(zz)
    ar, br, cr = combine(col3[..., 0])
    ag, bg_, cg = combine(col3[..., 1])
    ab, bb, cb = combine(col3[..., 2])
    # culled / degenerate faces can never be "inside" (w0 = -1 everywhere)
    c0 = jnp.where(bad, -1.0, c0)
    coef = jnp.stack([a0, b0, c0, a1, b1, c1,
                      az, bz, cz, ar, br, cr, ag, bg_, cg, ab, bb, cb], axis=-1)
    return coef.astype(jnp.float32)


def compute_face_coefficients(verts, faces, view_params, verts_feat=None,
                              light_direction=None, light_color=None,
                              out_size=64):
    """Camera + Gouraud lighting + per-face plane setup -> (N, F, 18) f32."""
    N, V, _ = verts.shape
    H = W = int(out_size)
    if verts_feat is None:
        verts_feat = jnp.ones((N * V, FEAT_C), jnp.float32)     # ones_like(verts_packed())
    feat = jnp.asarray(verts_feat, jnp.float32).reshape(N, V, FEAT_C)

    if light_direction is None:
        light_direction = np.array([[0.0, -0.6, 0.8]])
    if light_color is None:
        light_color = np.array([0.65, 0.3, 0.0])
    l = jnp.asarray(light_direction, jnp.float32).reshape(-1)[:3]
    l = l / (jnp.linalg.norm(l) + 1e-8)
    lc = jnp.asarray(light_color, jnp.float32).reshape(-1)
    am, df = lc[0], lc[1]
    # TODO(synk): specular term omitted (zero contribution for these defaults).

    normals = _vertex_normals(verts, faces)                     # (N, V, 3)
    ndl = jnp.maximum(jnp.einsum('nvk,k->nv', normals, l), 0.0)
    vcol = feat * (am + df * ndl[..., None])                    # (N, V, C)

    # Camera: param7dof = [rx, ry, rz, tx, ty, tz, focal].
    vp = jnp.asarray(view_params, jnp.float32)
    R = _euler_to_rotmat(vp[:, 0:3])
    t = vp[:, 3:6]
    foc = vp[:, 6]
    z_range = vp[:, -2]
    znear, zfar = z_range - 1.0, z_range + 1.0
    cam = jnp.einsum('nij,nvj->nvi', R, verts) + t[:, None, :]
    z = jnp.maximum(cam[..., 2], 1e-6)
    x_ndc = foc[:, None] * cam[..., 0] / z
    y_ndc = foc[:, None] * cam[..., 1] / z
    px = (x_ndc + 1.0) * 0.5 * W
    py = (1.0 - y_ndc) * 0.5 * H
    return _face_coefficients(px, py, z, vcol, faces, znear, zfar)


class MeshRenderWrapper:
    """JAX/Pallas re-implementation of models/render_wrapper.MeshRenderWrapper.

    The PyTorch3D `Meshes` argument is represented by explicit (verts, faces)
    arrays; `view_params` follows the 7-DoF convention
    [rx, ry, rz, tx, ty, tz, focal] (view_params[:, -2] is the camera depth,
    used for znear/zfar exactly as in the original forward)."""

    def __init__(self, out_size=64, shader='feat', sigma=1e-4, blur_radius=0.0,
                 faces_per_pixel=1, bin_size=None, max_faces_per_bin=None):
        if shader != 'feat':
            # TODO(synk): SoftSilhouetteShader / SoftGouraudShader variants not ported.
            raise NotImplementedError("only shader='feat' is implemented")
        self.my_shader = True
        self.out_size = int(out_size)
        self.sigma = float(sigma)
        self.blur_radius = float(blur_radius)
        self.faces_per_pixel = int(faces_per_pixel)
        # TODO(synk): sigma/blur_radius soft sigmoid+softmax blending and binned
        # rasterization (bin_size / max_faces_per_bin) not implemented; with
        # sigma->0, blur_radius=0, faces_per_pixel=1 the hard nearest-face
        # rasterization in the kernel is the limit behaviour.

    def forward(self, verts, faces, view_params, verts_feat=None,
                light_direction=None, light_color=None):
        H = W = self.out_size
        face_coef = compute_face_coefficients(
            verts, faces, view_params, verts_feat,
            light_direction, light_color, out_size=self.out_size)
        img = rasterize_pallas(face_coef, H, W)                 # (N, 4, H, W)
        image, mask = img[:, :FEAT_C], img[:, FEAT_C:FEAT_C + 1]
        return {'image': image, 'mask': mask}


# --------------------------------------------------------------------------
# Pure-JAX dense reference (same plane coefficients, nearest-face resolve).
# --------------------------------------------------------------------------
def _reference_render(face_coef, H, W):
    N, F, _ = face_coef.shape
    HW = H * W
    q = jnp.arange(HW, dtype=jnp.int32)
    xs = (q % W).astype(jnp.float32) + 0.5
    ys = (H - 1 - q // W).astype(jnp.float32) + 0.5
    c = face_coef

    def plane(k):
        return (c[:, :, k, None] * xs[None, None, :]
                + c[:, :, k + 1, None] * ys[None, None, :]
                + c[:, :, k + 2, None])                         # (N, F, HW)

    w0, w1, zf = plane(0), plane(3), plane(6)
    rf, gf, bf = plane(9), plane(12), plane(15)
    inside = (w0 >= 0) & (w1 >= 0) & (w0 + w1 <= 1.0)
    zm = jnp.where(inside, zf, Z_SENTINEL)
    idx = jnp.argmin(zm, axis=1)                                # (N, HW)
    covered = jnp.any(inside, axis=1)

    def take(f):
        return jnp.take_along_axis(f, idx[:, None, :], axis=1)[:, 0]

    bg = jnp.float32(BACKGROUND)
    r = jnp.where(covered, take(rf), bg)
    g = jnp.where(covered, take(gf), bg)
    b = jnp.where(covered, take(bf), bg)
    out = jnp.stack([r, g, b, covered.astype(jnp.float32)], axis=1)
    return out.reshape(N, FEAT_C + 1, H, W)


if __name__ == "__main__":
    key = jax.random.PRNGKey(0)
    N, V, out_size = 2, 8, 64

    # Deterministic synthetic mesh: jittered unit cube (8 verts, 12 tri faces).
    base_verts = jnp.array(
        [[-0.5, -0.5, -0.5], [0.5, -0.5, -0.5], [0.5, 0.5, -0.5], [-0.5, 0.5, -0.5],
         [-0.5, -0.5, 0.5], [0.5, -0.5, 0.5], [0.5, 0.5, 0.5], [-0.5, 0.5, 0.5]],
        jnp.float32)
    faces = jnp.array(
        [[0, 1, 2], [0, 2, 3], [4, 6, 5], [4, 7, 6], [0, 4, 5], [0, 5, 1],
         [1, 5, 6], [1, 6, 2], [2, 6, 7], [2, 7, 3], [3, 7, 4], [3, 4, 0]],
        jnp.int32)

    k1, k2 = jax.random.split(key)
    verts = base_verts[None] + 0.05 * jax.random.normal(k1, (N, V, 3), jnp.float32)
    verts_feat = jax.random.uniform(k2, (N * V, FEAT_C), jnp.float32)
    # [rx, ry, rz, tx, ty, tz, focal]; view_params[:, -2] is the camera depth.
    view_params = jnp.array([[0.30, 0.45, 0.10, 0.0, 0.0, 3.0, 2.5],
                             [0.10, -0.60, 0.00, 0.1, -0.1, 3.5, 2.5]], jnp.float32)

    wrapper = MeshRenderWrapper(out_size=out_size, shader='feat', sigma=1e-4)
    res = wrapper.forward(verts, faces, view_params, verts_feat)
    image = jax.block_until_ready(res['image'])
    mask = jax.block_until_ready(res['mask'])

    assert image.shape == (N, FEAT_C, out_size, out_size)
    assert mask.shape == (N, 1, out_size, out_size)
    assert bool(jnp.isfinite(image).all()) and bool(jnp.isfinite(mask).all())
    assert float(mask.sum()) > 0.0

    # Correctness check against a dense pure-JAX reference (allow a tiny
    # fraction of edge pixels to differ due to float order-of-operations).
    coef = compute_face_coefficients(verts, faces, view_params, verts_feat,
                                     None, None, out_size=out_size)
    ref = _reference_render(coef, out_size, out_size)
    got = jnp.concatenate([res['image'], res['mask']], axis=1)
    mismatch = jnp.mean((jnp.abs(got - ref) > 1e-2).astype(jnp.float32))
    assert float(mismatch) < 0.01, f"mismatch fraction {float(mismatch)}"

    print("KERNEL_OK")
</pallas_src>

<mosaic_0001>
module attributes {stable_mosaic.version = 11 : i64} {
  func.func @_render_kernel(%arg0: i32, %arg1: i32, %arg2: memref<432xf32, #tpu.memory_space<smem>>, %arg3: memref<2x8x256xf32, #tpu.memory_space<vmem>>, %arg4: memref<1x4x8x256xf32, #tpu.memory_space<vmem>>) attributes {dimension_semantics = [#tpu.dimension_semantics<parallel>, #tpu.dimension_semantics<parallel>], iteration_bounds = array<i64: 2, 2>, scalar_prefetch = 1 : i64, scratch_operands = 0 : i64, tpu.core_type = #tpu.core_type<tc>, window_params = [{transform_indices = @transform_0, window_bounds = array<i64: 2, 8, 256>}, {transform_indices = @transform_1, window_bounds = array<i64: 1, 4, 8, 256>}]} {
    %c0 = arith.constant 0 : index
    %c0_0 = arith.constant 0 : index
    %c0_1 = arith.constant 0 : index
    %0 = vector.load %arg3[%c0, %c0_0, %c0_1] : memref<2x8x256xf32, #tpu.memory_space<vmem>>, vector<1x8x256xf32>
    %1 = vector.shape_cast %0 : vector<1x8x256xf32> to vector<8x256xf32>
    %c1 = arith.constant 1 : index
    %c0_2 = arith.constant 0 : index
    %c0_3 = arith.constant 0 : index
    %2 = vector.load %arg3[%c1, %c0_2, %c0_3] : memref<2x8x256xf32, #tpu.memory_space<vmem>>, vector<1x8x256xf32>
    %3 = vector.shape_cast %2 : vector<1x8x256xf32> to vector<8x256xf32>
    %c216_i32 = arith.constant 216 : i32
    %4 = arith.muli %arg0, %c216_i32 : i32
    %cst = arith.constant 0.000000e+00 : f32
    %5 = vector.broadcast %cst : f32 to vector<8x256xf32>
    %cst_4 = arith.constant 1.000000e+30 : f32
    %6 = vector.broadcast %cst_4 : f32 to vector<8x256xf32>
    %c0_i32 = arith.constant 0 : i32
    %c12_i32 = arith.constant 12 : i32
    %7 = arith.addi %c0_i32, %c12_i32 : i32
    %c1_i32 = arith.constant 1 : i32
    %8:10 = scf.for %arg5 = %c0_i32 to %7 step %c1_i32 iter_args(%arg6 = %6, %arg7 = %5, %arg8 = %5, %arg9 = %5, %arg10 = %5, %arg11 = %5, %arg12 = %5, %arg13 = %5, %arg14 = %5, %arg15 = %5) -> (vector<8x256xf32>, vector<8x256xf32>, vector<8x256xf32>, vector<8x256xf32>, vector<8x256xf32>, vector<8x256xf32>, vector<8x256xf32>, vector<8x256xf32>, vector<8x256xf32>, vector<8x256xf32>)  : i32 {
      %c18_i32 = arith.constant 18 : i32
      %43 = arith.muli %arg5, %c18_i32 : i32
      %44 = arith.addi %4, %43 : i32
      %c0_i32_24 = arith.constant 0 : i32
      %45 = arith.addi %44, %c0_i32_24 : i32
      %46 = arith.index_cast %45 : i32 to index
      %47 = memref.load %arg2[%46] : memref<432xf32, #tpu.memory_space<smem>>
      %c1_i32_25 = arith.constant 1 : i32
      %48 = arith.addi %44, %c1_i32_25 : i32
      %49 = arith.index_cast %48 : i32 to index
      %50 = memref.load %arg2[%49] : memref<432xf32, #tpu.memory_space<smem>>
      %c2_i32 = arith.constant 2 : i32
      %51 = arith.addi %44, %c2_i32 : i32
      %52 = arith.index_cast %51 : i32 to index
      %53 = memref.load %arg2[%52] : memref<432xf32, #tpu.memory_space<smem>>
      %c3_i32 = arith.constant 3 : i32
      %54 = arith.addi %44, %c3_i32 : i32
      %55 = arith.index_cast %54 : i32 to index
      %56 = memref.load %arg2[%55] : memref<432xf32, #tpu.memory_space<smem>>
      %c4_i32 = arith.constant 4 : i32
      %57 = arith.addi %44, %c4_i32 : i32
      %58 = arith.index_cast %57 : i32 to index
      %59 = memref.load %arg2[%58] : memref<432xf32, #tpu.memory_space<smem>>
      %c5_i32 = arith.constant 5 : i32
      %60 = arith.addi %44, %c5_i32 : i32
      %61 = arith.index_cast %60 : i32 to index
      %62 = memref.load %arg2[%61] : memref<432xf32, #tpu.memory_space<smem>>
      %c6_i32 = arith.constant 6 : i32
      %63 = arith.addi %44, %c6_i32 : i32
      %64 = arith.index_cast %63 : i32 to index
      %65 = memref.load %arg2[%64] : memref<432xf32, #tpu.memory_space<smem>>
      %c7_i32 = arith.constant 7 : i32
      %66 = arith.addi %44, %c7_i32 : i32
      %67 = arith.index_cast %66 : i32 to index
      %68 = memref.load %arg2[%67] : memref<432xf32, #tpu.memory_space<smem>>
      %c8_i32 = arith.constant 8 : i32
      %69 = arith.addi %44, %c8_i32 : i32
      %70 = arith.index_cast %69 : i32 to index
      %71 = memref.load %arg2[%70] : memref<432xf32, #tpu.memory_space<smem>>
      %c9_i32 = arith.constant 9 : i32
      %72 = arith.addi %44, %c9_i32 : i32
      %73 = arith.index_cast %72 : i32 to index
      %74 = memref.load %arg2[%73] : memref<432xf32, #tpu.memory_space<smem>>
      %c10_i32 = arith.constant 10 : i32
      %75 = arith.addi %44, %c10_i32 : i32
      %76 = arith.index_cast %75 : i32 to index
      %77 = memref.load %arg2[%76] : memref<432xf32, #tpu.memory_space<smem>>
      %c11_i32 = arith.constant 11 : i32
      %78 = arith.addi %44, %c11_i32 : i32
      %79 = arith.index_cast %78 : i32 to index
      %80 = memref.load %arg2[%79] : memref<432xf32, #tpu.memory_space<smem>>
      %c12_i32_26 = arith.constant 12 : i32
      %81 = arith.addi %44, %c12_i32_26 : i32
      %82 = arith.index_cast %81 : i32 to index
      %83 = memref.load %arg2[%82] : memref<432xf32, #tpu.memory_space<smem>>
      %c13_i32 = arith.constant 13 : i32
      %84 = arith.addi %44, %c13_i32 : i32
      %85 = arith.index_cast %84 : i32 to index
      %86 = memref.load %arg2[%85] : memref<432xf32, #tpu.memory_space<smem>>
      %c14_i32 = arith.constant 14 : i32
      %87 = arith.addi %44, %c14_i32 : i32
      %88 = arith.index_cast %87 : i32 to index
      %89 = memref.load %arg2[%88] : memref<432xf32, #tpu.memory_space<smem>>
      %c15_i32 = arith.constant 15 : i32
      %90 = arith.addi %44, %c15_i32 : i32
      %91 = arith.index_cast %90 : i32 to index
      %92 = memref.load %arg2[%91] : memref<432xf32, #tpu.memory_space<smem>>
      %c16_i32 = arith.constant 16 : i32
      %93 = arith.addi %44, %c16_i32 : i32
      %94 = arith.index_cast %93 : i32 to index
      %95 = memref.load %arg2[%94] : memref<432xf32, #tpu.memory_space<smem>>
      %c17_i32 = arith.constant 17 : i32
      %96 = arith.addi %44, %c17_i32 : i32
      %97 = arith.index_cast %96 : i32 to index
      %98 = memref.load %arg2[%97] : memref<432xf32, #tpu.memory_space<smem>>
      %99 = vector.broadcast %47 : f32 to vector<8x256xf32>
      %100 = arith.mulf %99, %1 : vector<8x256xf32>
      %101 = vector.broadcast %50 : f32 to vector<8x256xf32>
      %102 = arith.mulf %101, %3 : vector<8x256xf32>
      %103 = arith.addf %100, %102 : vector<8x256xf32>
      %104 = vector.broadcast %53 : f32 to vector<8x256xf32>
      %105 = arith.addf %103, %104 : vector<8x256xf32>
      %106 = vector.broadcast %56 : f32 to vector<8x256xf32>
      %107 = arith.mulf %106, %1 : vector<8x256xf32>
      %108 = vector.broadcast %59 : f32 to vector<8x256xf32>
      %109 = arith.mulf %108, %3 : vector<8x256xf32>
      %110 = arith.addf %107, %109 : vector<8x256xf32>
      %111 = vector.broadcast %62 : f32 to vector<8x256xf32>
      %112 = arith.addf %110, %111 : vector<8x256xf32>
      %113 = vector.broadcast %65 : f32 to vector<8x256xf32>
      %114 = arith.mulf %113, %1 : vector<8x256xf32>
      %115 = vector.broadcast %68 : f32 to vector<8x256xf32>
      %116 = arith.mulf %115, %3 : vector<8x256xf32>
      %117 = arith.addf %114, %116 : vector<8x256xf32>
      %118 = vector.broadcast %71 : f32 to vector<8x256xf32>
      %119 = arith.addf %117, %118 : vector<8x256xf32>
      %cst_27 = arith.constant 0.000000e+00 : f32
      %120 = vector.broadcast %cst_27 : f32 to vector<8x256xf32>
      %121 = arith.cmpf oge, %105, %120 : vector<8x256xf32>
      %cst_28 = arith.constant 0.000000e+00 : f32
      %122 = vector.broadcast %cst_28 : f32 to vector<8x256xf32>
      %123 = arith.cmpf oge, %112, %122 : vector<8x256xf32>
      %124 = arith.andi %121, %123 : vector<8x256xi1>
      %125 = arith.addf %105, %112 : vector<8x256xf32>
      %cst_29 = arith.constant 1.000000e+00 : f32
      %126 = vector.broadcast %cst_29 : f32 to vector<8x256xf32>
      %127 = arith.cmpf ole, %125, %126 : vector<8x256xf32>
      %128 = arith.andi %124, %127 : vector<8x256xi1>
      %129 = arith.cmpf olt, %119, %arg6 : vector<8x256xf32>
      %130 = arith.andi %128, %129 : vector<8x256xi1>
      %131 = arith.select %130, %119, %arg6 : vector<8x256xi1>, vector<8x256xf32>
      %132 = vector.broadcast %74 : f32 to vector<8x256xf32>
      %133 = arith.select %130, %132, %arg7 : vector<8x256xi1>, vector<8x256xf32>
      %134 = vector.broadcast %77 : f32 to vector<8x256xf32>
      %135 = arith.select %130, %134, %arg8 : vector<8x256xi1>, vector<8x256xf32>
      %136 = vector.broadcast %80 : f32 to vector<8x256xf32>
      %137 = arith.select %130, %136, %arg9 : vector<8x256xi1>, vector<8x256xf32>
      %138 = vector.broadcast %83 : f32 to vector<8x256xf32>
      %139 = arith.select %130, %138, %arg10 : vector<8x256xi1>, vector<8x256xf32>
      %140 = vector.broadcast %86 : f32 to vector<8x256xf32>
      %141 = arith.select %130, %140, %arg11 : vector<8x256xi1>, vector<8x256xf32>
      %142 = vector.broadcast %89 : f32 to vector<8x256xf32>
      %143 = arith.select %130, %142, %arg12 : vector<8x256xi1>, vector<8x256xf32>
      %144 = vector.broadcast %92 : f32 to vector<8x256xf32>
      %145 = arith.select %130, %144, %arg13 : vector<8x256xi1>, vector<8x256xf32>
      %146 = vector.broadcast %95 : f32 to vector<8x256xf32>
      %147 = arith.select %130, %146, %arg14 : vector<8x256xi1>, vector<8x256xf32>
      %148 = vector.broadcast %98 : f32 to vector<8x256xf32>
      %149 = arith.select %130, %148, %arg15 : vector<8x256xi1>, vector<8x256xf32>
      scf.yield %131, %133, %135, %137, %139, %141, %143, %145, %147, %149 : vector<8x256xf32>, vector<8x256xf32>, vector<8x256xf32>, vector<8x256xf32>, vector<8x256xf32>, vector<8x256xf32>, vector<8x256xf32>, vector<8x256xf32>, vector<8x256xf32>, vector<8x256xf32>
    }
    %c12_i32_5 = arith.constant 12 : i32
    %cst_6 = arith.constant 1.000000e+29 : f32
    %9 = vector.broadcast %cst_6 : f32 to vector<8x256xf32>
    %10 = arith.cmpf olt, %8#0, %9 : vector<8x256xf32>
    %11 = arith.mulf %8#1, %1 : vector<8x256xf32>
    %12 = arith.mulf %8#2, %3 : vector<8x256xf32>
    %13 = arith.addf %11, %12 : vector<8x256xf32>
    %14 = arith.addf %13, %8#3 : vector<8x256xf32>
    %cst_7 = arith.constant 1.000000e+00 : f32
    %15 = vector.broadcast %cst_7 : f32 to vector<8x256xf32>
    %16 = arith.select %10, %14, %15 : vector<8x256xi1>, vector<8x256xf32>
    %c0_8 = arith.constant 0 : index
    %c0_9 = arith.constant 0 : index
    %c0_10 = arith.constant 0 : index
    %c0_11 = arith.constant 0 : index
    %17 = vector.load %arg4[%c0_8, %c0_9, %c0_10, %c0_11] : memref<1x4x8x256xf32, #tpu.memory_space<vmem>>, vector<1x1x8x256xf32>
    %18 = vector.shape_cast %17 : vector<1x1x8x256xf32> to vector<8x256xf32>
    %19 = vector.shape_cast %16 : vector<8x256xf32> to vector<1x1x8x256xf32>
    tpu.vector_store %arg4[%c0_8, %c0_9, %c0_10, %c0_11], %19 {strides = array<i32>} : memref<1x4x8x256xf32, #tpu.memory_space<vmem>>, vector<1x1x8x256xf32>,
    %20 = arith.mulf %8#4, %1 : vector<8x256xf32>
    %21 = arith.mulf %8#5, %3 : vector<8x256xf32>
    %22 = arith.addf %20, %21 : vector<8x256xf32>
    %23 = arith.addf %22, %8#6 : vector<8x256xf32>
    %cst_12 = arith.constant 1.000000e+00 : f32
    %24 = vector.broadcast %cst_12 : f32 to vector<8x256xf32>
    %25 = arith.select %10, %23, %24 : vector<8x256xi1>, vector<8x256xf32>
    %c0_13 = arith.constant 0 : index
    %c1_14 = arith.constant 1 : index
    %c0_15 = arith.constant 0 : index
    %c0_16 = arith.constant 0 : index
    %26 = vector.load %arg4[%c0_13, %c1_14, %c0_15, %c0_16] : memref<1x4x8x256xf32, #tpu.memory_space<vmem>>, vector<1x1x8x256xf32>
    %27 = vector.shape_cast %26 : vector<1x1x8x256xf32> to vector<8x256xf32>
    %28 = vector.shape_cast %25 : vector<8x256xf32> to vector<1x1x8x256xf32>
    tpu.vector_store %arg4[%c0_13, %c1_14, %c0_15, %c0_16], %28 {strides = array<i32>} : memref<1x4x8x256xf32, #tpu.memory_space<vmem>>, vector<1x1x8x256xf32>,
    %29 = arith.mulf %8#7, %1 : vector<8x256xf32>
    %30 = arith.mulf %8#8, %3 : vector<8x256xf32>
    %31 = arith.addf %29, %30 : vector<8x256xf32>
    %32 = arith.addf %31, %8#9 : vector<8x256xf32>
    %cst_17 = arith.constant 1.000000e+00 : f32
    %33 = vector.broadcast %cst_17 : f32 to vector<8x256xf32>
    %34 = arith.select %10, %32, %33 : vector<8x256xi1>, vector<8x256xf32>
    %c0_18 = arith.constant 0 : index
    %c2 = arith.constant 2 : index
    %c0_19 = arith.constant 0 : index
    %c0_20 = arith.constant 0 : index
    %35 = vector.load %arg4[%c0_18, %c2, %c0_19, %c0_20] : memref<1x4x8x256xf32, #tpu.memory_space<vmem>>, vector<1x1x8x256xf32>
    %36 = vector.shape_cast %35 : vector<1x1x8x256xf32> to vector<8x256xf32>
    %37 = vector.shape_cast %34 : vector<8x256xf32> to vector<1x1x8x256xf32>
    tpu.vector_store %arg4[%c0_18, %c2, %c0_19, %c0_20], %37 {strides = array<i32>} : memref<1x4x8x256xf32, #tpu.memory_space<vmem>>, vector<1x1x8x256xf32>,
    %38 = arith.extui %10 : vector<8x256xi1> to vector<8x256xi32>
    %39 = arith.sitofp %38 : vector<8x256xi32> to vector<8x256xf32>
    %c0_21 = arith.constant 0 : index
    %c3 = arith.constant 3 : index
    %c0_22 = arith.constant 0 : index
    %c0_23 = arith.constant 0 : index
    %40 = vector.load %arg4[%c0_21, %c3, %c0_22, %c0_23] : memref<1x4x8x256xf32, #tpu.memory_space<vmem>>, vector<1x1x8x256xf32>
    %41 = vector.shape_cast %40 : vector<1x1x8x256xf32> to vector<8x256xf32>
    %42 = vector.shape_cast %39 : vector<8x256xf32> to vector<1x1x8x256xf32>
    tpu.vector_store %arg4[%c0_21, %c3, %c0_22, %c0_23], %42 {strides = array<i32>} : memref<1x4x8x256xf32, #tpu.memory_space<vmem>>, vector<1x1x8x256xf32>,
    return
  }
  func.func @transform_0(%arg0: i32, %arg1: i32, %arg2: memref<432xf32, #tpu.memory_space<smem>>) -> (i32, i32, i32) {
    %c0_i32 = arith.constant 0 : i32
    %c0_i32_0 = arith.constant 0 : i32
    %c0_i32_1 = arith.constant 0 : i32
    return %c0_i32, %arg1, %c0_i32_0 : i32, i32, i32
  }
  func.func @transform_1(%arg0: i32, %arg1: i32, %arg2: memref<432xf32, #tpu.memory_space<smem>>) -> (i32, i32, i32, i32) {
    %c0_i32 = arith.constant 0 : i32
    %c0_i32_0 = arith.constant 0 : i32
    %c0_i32_1 = arith.constant 0 : i32
    return %arg0, %c0_i32, %arg1, %c0_i32_0 : i32, i32, i32, i32
  }
}

</mosaic_0001>

<llo_original>
// kernel: tpu_custom_call.1
$region0: #{tpu_custom_call.1}
  #allocation0 [shape = 'u32[]', space=smem, size = 0x4, offset = 0x4, fixed_abs, tag = 'smem constant byte address 0x4 - core index']
  #allocation1 [shape = 'u32[144,128]{1,0:T(1,128)}', space=vmem, size = 0x12000, scoped, tag = 'internal scratch']
  #allocation2 [shape = 's32[1]{0}', space=sflag, size = 0x4, scoped, tag = 'scoped memory for tpu_custom_call.1']
  #allocation3 [shape = 'u8[2048]{0}', space=smem, size = 0x800, scoped, tag = 'prefetched SMEM operand 0']
  %s0 = inlined_call_operand.hbm [shape: f32[432], index: 0, kind: input, shape index: {}]
  %s1 = inlined_call_operand.hbm [shape: f32[2,16,256], index: 1, kind: input, shape index: {}]
  %s2 = inlined_call_operand.hbm [shape: f32[2,4,16,256], index: 2, kind: output, shape index: {}]
  %s3 = sld [smem:[#allocation0]]
  $region48: #{tpu_custom_call.1} parent=0
    _
  %s5 = ssub.s32 1, %s3
  %s6 = scalar_select 0, %s5, %s3
  %8 = dma.hbm_to_smem %s0, 64, [#allocation3], [#allocation2]
  %9 = dma.done [#allocation2], 64
  %10 = sfence
  $region1: #{tpu_custom_call.1} parent=0
    #allocation4 [shape = 'u8[32768]{0}', space=vmem, size = 0x8000, scoped, tag = 'input window, operand 1']
    #allocation5 [shape = 's32[2]{0}', space=sflag, size = 0x8, scoped, tag = 'scoped memory for tpu_custom_call.1']
    #allocation6 [shape = 's32[2]{0}', space=sflag, size = 0x8, scoped, tag = 'scoped memory for tpu_custom_call.1']
    #allocation7 [shape = 'u8[65536]{0}', space=vmem, size = 0x10000, scoped, tag = 'output window, operand 0']
    %11 = vsyncpa [#allocation5], 0
    %s12 = scalar_lea.sflag [#allocation5], 1
    %13 = vsyncpa %s12, 0
    %14 = vsyncpa [#allocation6], 0
    %s15 = scalar_lea.sflag [#allocation6], 1
    %16 = vsyncpa %s15, 0
    loop: start=0, step=1, limit=6
    $region2: #{tpu_custom_call.1} parent=1 // loop_pre_header
      _
    $region3: #{tpu_custom_call.1} parent=1 // loop_header
      %s18 = sphi 0, %s22
      %p19 = scmp.ge.s32.totalorder %s18, 6
      %s25 = sphi 0, %s37
      %s26 = sphi 0, %s33
      %s27 = sphi 0, %s25
      %s28 = sphi 0, %s26
      %s29 = sphi 0, %s27
      %s30 = sphi 0, %s28
      %s40 = sphi 0, %s42
      %s43 = sphi 0, %s40
      %s44 = sphi 0, %s43
      %s60 = sphi 0, %s44
      %s68 = sphi 0, %s70
      %s71 = sphi 0, %s68
      %s72 = sphi 0, %s71
      %s88 = sphi 0, %s72
    $region4: #{tpu_custom_call.1} parent=1 // loop_header_branch
      %21 = sbr.rel (%p19) target = $region8
    $region5: #{tpu_custom_call.1} parent=1 // loop_body
      %s23 = ssub.s32 %s18, 1
      %s24 = ssub.s32 %s18, 2
      %s31 = sadd.s32 1, %s26
      %p32 = scmp.ge.s32.totalorder %s31, 2
      %s33 = scalar_select %p32, 0, %s31
      %s34 = sadd.s32 1, %s25
      %s35 = scalar_select %p32, %s34, %s25
      %p36 = scmp.ge.s32.totalorder %s35, 2
      %s37 = scalar_select %p36, 0, %s35
      %s38 = ssub.s32 %s26, %s33
      %p39 = scmp.eq.s32.totalorder %s38, 0
      %s41 = sadd.s32 %s40, 1
      %s42 = scalar_select %p39, %s40, %s41
      %p45 = pneg %p39
      %p46 = scmp.eq.s32.totalorder %s18, 3
      %p47 = por %p45, %p46
      %p48 = scmp.ne.s32.totalorder %s40, %s43
      %p49 = scmp.eq.s32.totalorder %s18, 0
      %p50 = por %p48, %p49
      %p51 = scmp.ne.s32.totalorder %s40, %s43
      %p52 = scmp.eq.s32.totalorder %s23, 3
      %p53 = por %p51, %p52
      %p54 = scmp.ne.s32.totalorder %s43, %s44
      %p55 = scmp.eq.s32.totalorder %s23, 0
      %p56 = por %p54, %p55
      %p57 = scmp.ne.s32.totalorder %s43, %s44
      %p58 = scmp.eq.s32.totalorder %s24, 3
      %p59 = por %p57, %p58
      %p61 = scmp.ne.s32.totalorder %s44, %s60
      %p62 = scmp.eq.s32.totalorder %s24, 0
      %p63 = por %p61, %p62
      %s64 = ssub.s32 %s25, %s37
      %s65 = ssub.s32 %s26, %s33
      %s66 = sor.u32 %s64, %s65
      %p67 = scmp.eq.s32.totalorder %s66, 0
      %s69 = sadd.s32 %s68, 1
      %s70 = scalar_select %p67, %s68, %s69
      %p73 = pneg %p67
      %p74 = scmp.eq.s32.totalorder %s18, 3
      %p75 = por %p73, %p74
      %p76 = scmp.ne.s32.totalorder %s68, %s71
      %p77 = scmp.eq.s32.totalorder %s18, 0
      %p78 = por %p76, %p77
      %p79 = scmp.ne.s32.totalorder %s68, %s71
      %p80 = scmp.eq.s32.totalorder %s23, 3
      %p81 = por %p79, %p80
      %p82 = scmp.ne.s32.totalorder %s71, %s72
      %p83 = scmp.eq.s32.totalorder %s23, 0
      %p84 = por %p82, %p83
      %p85 = scmp.ne.s32.totalorder %s71, %s72
      %p86 = scmp.eq.s32.totalorder %s24, 3
      %p87 = por %p85, %p86
      %p89 = scmp.ne.s32.totalorder %s72, %s88
      %p90 = scmp.eq.s32.totalorder %s24, 0
      %p91 = por %p89, %p90
      %p92 = scmp.le.s32.totalorder 1, %s18
      %p93 = scmp.lt.s32.totalorder %s18, 5
      %p94 = pnand %p92, %p93
      %p95 = pneg %p94
      // Predicated region
      $region9: #{tpu_custom_call.1} parent=5 // pred_check
        _
      $region10: #{tpu_custom_call.1} parent=5 // pred_check_branch
        %97 = sbr.rel (%p94) target = $region12
      $region11: #{tpu_custom_call.1} parent=5 // pred_region
        %s98 = ssub.s32 %s18, 1
      $region12: #{tpu_custom_call.1} parent=5 // pred_fallthru
        _
      %p99 = scmp.lt.s32.totalorder %s18, 4
      // Predicated region
      $region13: #{tpu_custom_call.1} parent=5 // pred_check
        %p100 = pneg %p99
      $region14: #{tpu_custom_call.1} parent=5 // pred_check_branch
        %102 = sbr.rel (%p100) target = $region16
      $region15: #{tpu_custom_call.1} parent=5 // pred_region
        // Predicated region
        $region17: #{tpu_custom_call.1} parent=15 // pred_check
          %p103 = pneg %p50
        $region18: #{tpu_custom_call.1} parent=15 // pred_check_branch
          %105 = sbr.rel (%p103) target = $region20
        $region19: #{tpu_custom_call.1} parent=15 // pred_region
          %s106 = sand.u32 %s40, 1
          %s107 = scalar_lea.sflag [#allocation5], %s106
          %s108 = sand.u32 %s40, 1
          %s109 = smul.addr %s108, 32
          %s110 = scalar_lea.vmem [#allocation4], %s109
          %s112 = ssub.s32 512, 512
          %113 = vsyncadd %s107, %s112
          %s114 = smul.addr %s26, 2
          %s115 = smul.addr %s114, 128
          %s116 = scalar_lea.hbm %s1, %s115
          %s117 = sshll.u32 %s110, 4
          %s118 = int_to_ptr.vmem [resolvable:$true] %s117
          %123 = dma.hbm_to_vmem [thread:$0]  %s116, 512, %s118, %s107, 512, 256, 16
        $region20: #{tpu_custom_call.1} parent=15 // pred_fallthru
          _
      $region16: #{tpu_custom_call.1} parent=5 // pred_fallthru
        _
      %p124 = scmp.le.s32.totalorder 1, %s18
      %p125 = scmp.lt.s32.totalorder %s18, 5
      %p126 = pnand %p124, %p125
      %p127 = pneg %p126
      // Predicated region
      $region21: #{tpu_custom_call.1} parent=5 // pred_check
        _
      $region22: #{tpu_custom_call.1} parent=5 // pred_check_branch
        %129 = sbr.rel (%p126) target = $region24
      $region23: #{tpu_custom_call.1} parent=5 // pred_region
        %s130 = ssub.s32 %s18, 1
        %s131 = sand.u32 %s43, 1
        %s132 = scalar_lea.sflag [#allocation5], %s131
        %s133 = sand.u32 %s43, 1
        %s134 = smul.addr %s133, 32
        %s135 = scalar_lea.vmem [#allocation4], %s134
        // Predicated region
        $region25: #{tpu_custom_call.1} parent=23 // pred_check
          %p136 = pneg %p56
        $region26: #{tpu_custom_call.1} parent=23 // pred_check_branch
          %138 = sbr.rel (%p136) target = $region28
        $region27: #{tpu_custom_call.1} parent=23 // pred_region
          %139 = dma.done %s132, 512
        $region28: #{tpu_custom_call.1} parent=23 // pred_fallthru
          _
        %s140 = sand.u32 %s43, 1
        %s141 = scalar_lea.sflag [#allocation5], %s140
        %s142 = sand.u32 %s43, 1
        %s143 = smul.addr %s142, 32
        %s144 = scalar_lea.vmem [#allocation4], %s143
        %p145 = pneg %p56
        %p146 = pneg %p53
        %p147 = pneg %p84
        %p148 = pneg %p81
        %s149 = sand.u32 %s71, 1
        %s150 = scalar_lea.sflag [#allocation6], %s149
        %s151 = sand.u32 %s71, 1
        %s152 = smul.addr %s151, 64
        %s153 = scalar_lea.vmem [#allocation7], %s152
        %v154 = vld [vmem:[%s135] sm:$0xff]
        %v155 = vld [vmem:[%s135 + $0x8] sm:$0xff]
        %s156 = scalar_lea.vmem %s135, 16 [#allocation4]
        %v157 = vld [vmem:[%s156] sm:$0xff]
        %v158 = vld [vmem:[%s156 + $0x8] sm:$0xff]
        %s159 = smul.u32 %s27, 216
        loop: start=0, step=1, limit=12
        $region29: #{tpu_custom_call.1} parent=23 // loop_pre_header
          _
        $region30: #{tpu_custom_call.1} parent=23 // loop_header
          %s161 = sphi 0, %s165
          %p162 = scmp.ge.s32.totalorder %s161, 12
          %v166 = vphi 1e+30, %v272
          %v167 = vphi 1e+30, %v273
          %v168 = vphi 0.0, %v275
          %v169 = vphi 0.0, %v276
          %v170 = vphi 0.0, %v278
          %v171 = vphi 0.0, %v279
          %v172 = vphi 0.0, %v281
          %v173 = vphi 0.0, %v282
          %v174 = vphi 0.0, %v284
          %v175 = vphi 0.0, %v285
          %v176 = vphi 0.0, %v287
          %v177 = vphi 0.0, %v288
          %v178 = vphi 0.0, %v290
          %v179 = vphi 0.0, %v291
          %v180 = vphi 0.0, %v293
          %v181 = vphi 0.0, %v294
          %v182 = vphi 0.0, %v296
          %v183 = vphi 0.0, %v297
          %v184 = vphi 0.0, %v299
          %v185 = vphi 0.0, %v300
        $region31: #{tpu_custom_call.1} parent=23 // loop_header_branch
          %164 = sbr.rel (%p162) target = $region35
        $region32: #{tpu_custom_call.1} parent=23 // loop_body
          %s186 = smul.u32 %s161, 18
          %s187 = sadd.s32 %s159, %s186
          %s188 = sld [smem:[#allocation3 + %s187]]
          %s189 = sadd.s32 %s187, 1
          %s190 = sld [smem:[#allocation3 + %s189]]
          %s191 = sadd.s32 %s187, 2
          %s192 = sld [smem:[#allocation3 + %s191]]
          %s193 = sadd.s32 %s187, 3
          %s194 = sld [smem:[#allocation3 + %s193]]
          %s195 = sadd.s32 %s187, 4
          %s196 = sld [smem:[#allocation3 + %s195]]
          %s197 = sadd.s32 %s187, 5
          %s198 = sld [smem:[#allocation3 + %s197]]
          %s199 = sadd.s32 %s187, 6
          %s200 = sld [smem:[#allocation3 + %s199]]
          %s201 = sadd.s32 %s187, 7
          %s202 = sld [smem:[#allocation3 + %s201]]
          %s203 = sadd.s32 %s187, 8
          %s204 = sld [smem:[#allocation3 + %s203]]
          %s205 = sadd.s32 %s187, 9
          %s206 = sld [smem:[#allocation3 + %s205]]
          %s207 = sadd.s32 %s187, 10
          %s208 = sld [smem:[#allocation3 + %s207]]
          %s209 = sadd.s32 %s187, 11
          %s210 = sld [smem:[#allocation3 + %s209]]
          %s211 = sadd.s32 %s187, 12
          %s212 = sld [smem:[#allocation3 + %s211]]
          %s213 = sadd.s32 %s187, 13
          %s214 = sld [smem:[#allocation3 + %s213]]
          %s215 = sadd.s32 %s187, 14
          %s216 = sld [smem:[#allocation3 + %s215]]
          %s217 = sadd.s32 %s187, 15
          %s218 = sld [smem:[#allocation3 + %s217]]
          %s219 = sadd.s32 %s187, 16
          %s220 = sld [smem:[#allocation3 + %s219]]
          %s221 = sadd.s32 %s187, 17
          %s222 = sld [smem:[#allocation3 + %s221]]
          %v223 = vstv %s188
          %v224 = vmul.f32 %v223, %v154
          %v225 = vmul.f32 %v223, %v155
          %v226 = vstv %s190
          %v227 = vmul.f32 %v226, %v157
          %v228 = vmul.f32 %v226, %v158
          %v229 = vadd.f32 %v224, %v227
          %v230 = vadd.f32 %v225, %v228
          %v231 = vstv %s192
          %v232 = vadd.f32 %v229, %v231
          %v233 = vadd.f32 %v230, %v231
          %v234 = vstv %s194
          %v235 = vmul.f32 %v234, %v154
          %v236 = vmul.f32 %v234, %v155
          %v237 = vstv %s196
          %v238 = vmul.f32 %v237, %v157
          %v239 = vmul.f32 %v237, %v158
          %v240 = vadd.f32 %v235, %v238
          %v241 = vadd.f32 %v236, %v239
          %v242 = vstv %s198
          %v243 = vadd.f32 %v240, %v242
          %v244 = vadd.f32 %v241, %v242
          %v245 = vstv %s200
          %v246 = vmul.f32 %v245, %v154
          %v247 = vmul.f32 %v245, %v155
          %v248 = vstv %s202
          %v249 = vmul.f32 %v248, %v157
          %v250 = vmul.f32 %v248, %v158
          %v251 = vadd.f32 %v246, %v249
          %v252 = vadd.f32 %v247, %v250
          %v253 = vstv %s204
          %v254 = vadd.f32 %v251, %v253
          %v255 = vadd.f32 %v252, %v253
          %vm256 = vcmp.ge.f32.partialorder %v232, 0.0
          %vm257 = vcmp.ge.f32.partialorder %v233, 0.0
          %vm258 = vcmp.ge.f32.partialorder %v243, 0.0
          %vm259 = vcmp.ge.f32.partialorder %v244, 0.0
          %vm260 = vmand %vm256, %vm258
          %vm261 = vmand %vm257, %vm259
          %v262 = vadd.f32 %v232, %v243
          %v263 = vadd.f32 %v233, %v244
          %vm264 = vcmp.le.f32.partialorder %v262, 1.0
          %vm265 = vcmp.le.f32.partialorder %v263, 1.0
          %vm266 = vmand %vm260, %vm264
          %vm267 = vmand %vm261, %vm265
          %vm268 = vcmp.lt.f32.partialorder %v254, %v166
          %vm269 = vcmp.lt.f32.partialorder %v255, %v167
          %vm270 = vmand %vm266, %vm268
          %vm271 = vmand %vm267, %vm269
          %v272 = vsel %vm270, %v254, %v166
          %v273 = vsel %vm271, %v255, %v167
          %v274 = vstv %s206
          %v275 = vsel %vm270, %v274, %v168
          %v276 = vsel %vm271, %v274, %v169
          %v277 = vstv %s208
          %v278 = vsel %vm270, %v277, %v170
          %v279 = vsel %vm271, %v277, %v171
          %v280 = vstv %s210
          %v281 = vsel %vm270, %v280, %v172
          %v282 = vsel %vm271, %v280, %v173
          %v283 = vstv %s212
          %v284 = vsel %vm270, %v283, %v174
          %v285 = vsel %vm271, %v283, %v175
          %v286 = vstv %s214
          %v287 = vsel %vm270, %v286, %v176
          %v288 = vsel %vm271, %v286, %v177
          %v289 = vstv %s216
          %v290 = vsel %vm270, %v289, %v178
          %v291 = vsel %vm271, %v289, %v179
          %v292 = vstv %s218
          %v293 = vsel %vm270, %v292, %v180
          %v294 = vsel %vm271, %v292, %v181
          %v295 = vstv %s220
          %v296 = vsel %vm270, %v295, %v182
          %v297 = vsel %vm271, %v295, %v183
          %v298 = vstv %s222
          %v299 = vsel %vm270, %v298, %v184
          %v300 = vsel %vm271, %v298, %v185
        $region33: #{tpu_custom_call.1} parent=23 // loop_footer
          %s165 = sadd.s32 1, %s161
        $region34: #{tpu_custom_call.1} parent=23 // loop_footer_branch
          %160 = sbr.rel target = $region30
        $region35: #{tpu_custom_call.1} parent=23 // loop_exit
          _
        %vm301 = vcmp.lt.f32.partialorder %v166, 1e+29
        %vm302 = vcmp.lt.f32.partialorder %v167, 1e+29
        %v303 = vmul.f32 %v168, %v154
        %v304 = vmul.f32 %v169, %v155
        %v305 = vmul.f32 %v170, %v157
        %v306 = vmul.f32 %v171, %v158
        %v307 = vadd.f32 %v303, %v305
        %v308 = vadd.f32 %v304, %v306
        %v309 = vadd.f32 %v307, %v172
        %v310 = vadd.f32 %v308, %v173
        %v311 = vsel %vm301, %v309, 1.0
        %v312 = vsel %vm302, %v310, 1.0
        %313 = vst [vmem:[%s153] sm:$0xff] %v311
        %314 = vst [vmem:[%s153 + $0x8] sm:$0xff] %v312
        %v315 = vmul.f32 %v174, %v154
        %v316 = vmul.f32 %v175, %v155
        %v317 = vmul.f32 %v176, %v157
        %v318 = vmul.f32 %v177, %v158
        %v319 = vadd.f32 %v315, %v317
        %v320 = vadd.f32 %v316, %v318
        %v321 = vadd.f32 %v319, %v178
        %v322 = vadd.f32 %v320, %v179
        %v323 = vsel %vm301, %v321, 1.0
        %v324 = vsel %vm302, %v322, 1.0
        %s325 = scalar_lea.vmem %s153, 16 [#allocation7]
        %326 = vst [vmem:[%s325] sm:$0xff] %v323
        %327 = vst [vmem:[%s325 + $0x8] sm:$0xff] %v324
        %v328 = vmul.f32 %v180, %v154
        %v329 = vmul.f32 %v181, %v155
        %v330 = vmul.f32 %v182, %v157
        %v331 = vmul.f32 %v183, %v158
        %v332 = vadd.f32 %v328, %v330
        %v333 = vadd.f32 %v329, %v331
        %v334 = vadd.f32 %v332, %v184
        %v335 = vadd.f32 %v333, %v185
        %v336 = vsel %vm301, %v334, 1.0
        %v337 = vsel %vm302, %v335, 1.0
        %s338 = scalar_lea.vmem %s153, 32 [#allocation7]
        %339 = vst [vmem:[%s338] sm:$0xff] %v336
        %340 = vst [vmem:[%s338 + $0x8] sm:$0xff] %v337
        %v341 = vsel %vm301, 1, 0
        %v342 = vsel %vm302, 1, 0
        %v343 = vcvt.s32.f32 %v341
        %v344 = vcvt.s32.f32 %v342
        %s345 = scalar_lea.vmem %s153, 48 [#allocation7]
        %346 = vst [vmem:[%s345] sm:$0xff] %v343
        %347 = vst [vmem:[%s345 + $0x8] sm:$0xff] %v344
        %s348 = sand.u32 %s71, 1
        %s349 = scalar_lea.sflag [#allocation6], %s348
        %s350 = sand.u32 %s71, 1
        %s351 = smul.addr %s350, 64
        %s352 = scalar_lea.vmem [#allocation7], %s351
        // Predicated region
        $region36: #{tpu_custom_call.1} parent=23 // pred_check
          %p353 = pneg %p81
        $region37: #{tpu_custom_call.1} parent=23 // pred_check_branch
          %355 = sbr.rel (%p353) target = $region39
        $region38: #{tpu_custom_call.1} parent=23 // pred_region
          %s357 = ssub.s32 1024, 1024
          %358 = vsyncadd %s349, %s357
          %s359 = smul.addr %s28, 2
          %s360 = smul.addr %s27, 16
          %s361 = sadd.s32 %s359, %s360
          %s362 = smul.addr %s361, 128
          %s363 = scalar_lea.hbm %s2, %s362
          %s364 = sshll.u32 %s352, 4
          %s365 = int_to_ptr.vmem [resolvable:$true] %s364
          %370 = dma.vmem_to_hbm [thread:$0]  %s365, 1024, %s363, %s349, 256, 512, 16
        $region39: #{tpu_custom_call.1} parent=23 // pred_fallthru
          _
      $region24: #{tpu_custom_call.1} parent=5 // pred_fallthru
        _
      %p371 = scmp.le.s32.totalorder 2, %s18
      // Predicated region
      $region40: #{tpu_custom_call.1} parent=5 // pred_check
        %p372 = pneg %p371
      $region41: #{tpu_custom_call.1} parent=5 // pred_check_branch
        %374 = sbr.rel (%p372) target = $region43
      $region42: #{tpu_custom_call.1} parent=5 // pred_region
        %s375 = ssub.s32 %s18, 2
        // Predicated region
        $region44: #{tpu_custom_call.1} parent=42 // pred_check
          %p376 = pneg %p87
        $region45: #{tpu_custom_call.1} parent=42 // pred_check_branch
          %378 = sbr.rel (%p376) target = $region47
        $region46: #{tpu_custom_call.1} parent=42 // pred_region
          %s379 = sand.u32 %s72, 1
          %s380 = scalar_lea.sflag [#allocation6], %s379
          %s381 = sand.u32 %s72, 1
          %s382 = smul.addr %s381, 64
          %s383 = scalar_lea.vmem [#allocation7], %s382
          %384 = dma.done %s380, 1024
        $region47: #{tpu_custom_call.1} parent=42 // pred_fallthru
          _
      $region43: #{tpu_custom_call.1} parent=5 // pred_fallthru
        _
    $region6: #{tpu_custom_call.1} parent=1 // loop_footer
      %s22 = sadd.s32 1, %s18
    $region7: #{tpu_custom_call.1} parent=1 // loop_footer_branch
      %17 = sbr.rel target = $region3
    $region8: #{tpu_custom_call.1} parent=1 // loop_exit
      _
    %385 = vsyncpa [#allocation5], 1
    %s386 = scalar_lea.sflag [#allocation5], 1
    %387 = vsyncpa %s386, 1
    %388 = vsyncpa [#allocation6], 1
    %s389 = scalar_lea.sflag [#allocation6], 1
    %390 = vsyncpa %s389, 1

</llo_original>
